<compile_context>
chip_gen: v7x
topology: tpu7x:2x2x1
jax: 0.10.0
libtpu: 0.0.40
codegen_flags: <defaults>
</compile_context>

<pallas_src>
import jax
import jax.numpy as jnp
from jax.experimental import pallas as pl
from jax.experimental.pallas import tpu as pltpu

BN_EPS = 1e-5


# ---------------------------------------------------------------------------
# Fused kernel: AdjustLayer (BN-folded 1x1 conv) + GAM, one batch element/step.
# All tensors are laid out (channels, HW) with HW on the lane axis.
# ---------------------------------------------------------------------------
def _fused_kernel(x_ref, aw_ref, ab_ref, tw_ref, tb_ref, gw_ref, gb_ref,
                  ww_ref, wb_ref, o_ref):
    x = x_ref[...].astype(jnp.float32)                                   # (Cin, HW)

    # AdjustLayer: 1x1 conv + BN folded  ->  y = aw @ x + ab             (Cout, HW)
    y = jnp.dot(aw_ref[...], x, preferred_element_type=jnp.float32) + ab_ref[...]

    # GAM theta: 1x1 conv                ->  theta = tw @ y + tb         (Ci, HW)
    theta = jnp.dot(tw_ref[...], y, preferred_element_type=jnp.float32) + tb_ref[...]

    # GAM g: single-output 1x1 conv as VPU multiply + sublane reduce     (1, HW)
    g = jnp.sum(theta * gw_ref[...], axis=0, keepdims=True) + gb_ref[...]

    # softmax over HW (lane axis -> dense EUP/XLU work)
    g = g - jnp.max(g, axis=1, keepdims=True)
    e = jnp.exp(g)
    g_soft = e * pl.reciprocal(jnp.sum(e, axis=1, keepdims=True), approx=True)

    # f = theta @ g_soft^T (global attention pooling), then gating       (Ci, HW)
    f = jnp.sum(theta * g_soft, axis=1, keepdims=True)                   # (Ci, 1)
    f_x = theta * f

    # GAM W: 1x1 conv + BN folded, plus residual                         (Cout, HW)
    wy = jnp.dot(ww_ref[...], f_x, preferred_element_type=jnp.float32) + wb_ref[...]
    o_ref[...] = (wy + y).astype(o_ref.dtype)


# ---------------------------------------------------------------------------
# Wrapper: BN folding + crop + single pallas_call
# ---------------------------------------------------------------------------
def adjust_with_gam(x_nchw, params):
    """Full forward. x_nchw: (B, Cin, H, W) -> (B, Cout, Hc, Wc) NCHW, like torch."""
    B, Cin, H, W = x_nchw.shape
    Cout = params["ds_w"].shape[0]
    Ci = params["t_w"].shape[0]

    # The AdjustLayer crop (applied when spatial < 20) commutes with the pointwise
    # 1x1-conv + BN, so crop the input once, pre-kernel (tiny static slice).
    if W < 20:
        x_nchw = x_nchw[:, :, 4:11, 4:11]
    Hc, Wc = x_nchw.shape[2], x_nchw.shape[3]
    HW = Hc * Wc
    x_flat = x_nchw.reshape(B, Cin, HW)          # contiguous; channels-first, HW on lanes

    f32 = jnp.float32
    # --- fold eval-mode BatchNorms into the 1x1 convs (wrapper-side, tiny) ---
    ds_scale = params["ds_bn_g"] * jax.lax.rsqrt(params["ds_bn_v"] + BN_EPS)          # (Cout,)
    aw = (ds_scale[:, None] * params["ds_w"]).astype(f32)                             # (Cout, Cin)
    ab = ((params["ds_bn_b"] - params["ds_bn_m"] * ds_scale)[:, None]).astype(f32)    # (Cout, 1)

    tw = params["t_w"].astype(f32)                                                    # (Ci, Cout)
    tb = params["t_b"][:, None].astype(f32)                                           # (Ci, 1)
    gw = params["g_w"].reshape(Ci, 1).astype(f32)                                     # (Ci, 1)
    gb = params["g_b"].reshape(1, 1).astype(f32)                                      # (1, 1)

    w_scale = params["w_bn_g"] * jax.lax.rsqrt(params["w_bn_v"] + BN_EPS)             # (Cout,)
    ww = (w_scale[:, None] * params["w_w"]).astype(f32)                               # (Cout, Ci)
    wb = ((w_scale * (params["w_b"] - params["w_bn_m"]) + params["w_bn_b"])[:, None]
          ).astype(f32)                                                               # (Cout, 1)

    def rep(shape):
        return pl.BlockSpec(shape, lambda b: (0,) * len(shape))

    out = pl.pallas_call(
        _fused_kernel,
        out_shape=jax.ShapeDtypeStruct((B, Cout, HW), x_flat.dtype),
        grid=(B,),
        in_specs=[
            pl.BlockSpec((None, Cin, HW), lambda b: (b, 0, 0)),   # x, batch dim squeezed
            rep((Cout, Cin)), rep((Cout, 1)),                     # adjust folded w, b
            rep((Ci, Cout)), rep((Ci, 1)),                        # theta w, b
            rep((Ci, 1)), rep((1, 1)),                            # g w (column), b
            rep((Cout, Ci)), rep((Cout, 1)),                      # W folded w, b
        ],
        out_specs=pl.BlockSpec((None, Cout, HW), lambda b: (b, 0, 0)),
        compiler_params=pltpu.CompilerParams(dimension_semantics=("parallel",)),
    )(x_flat, aw, ab, tw, tb, gw, gb, ww, wb)

    return out.reshape(B, Cout, Hc, Wc)


# ---------------------------------------------------------------------------
# Pure-JAX reference (mirrors the PyTorch forward, eval-mode BN, NCHW layout)
# ---------------------------------------------------------------------------
def reference(x, p):
    hp = jax.lax.Precision.HIGHEST

    def bn(t, g, b, m, v):
        s = (g * jax.lax.rsqrt(v + BN_EPS))[None, :, None, None]
        return (t - m[None, :, None, None]) * s + b[None, :, None, None]

    y = jnp.einsum('oc,bchw->bohw', p["ds_w"], x, precision=hp)
    y = bn(y, p["ds_bn_g"], p["ds_bn_b"], p["ds_bn_m"], p["ds_bn_v"])
    if y.shape[3] < 20:
        y = y[:, :, 4:11, 4:11]
    B, C, Hc, Wc = y.shape
    Ci = p["t_w"].shape[0]

    theta = jnp.einsum('ic,bchw->bihw', p["t_w"], y, precision=hp) + p["t_b"][None, :, None, None]
    g = jnp.einsum('oi,bihw->bohw', p["g_w"], theta, precision=hp) + p["g_b"][None, :, None, None]
    g = jax.nn.softmax(g.reshape(B, 1, Hc * Wc), axis=-1)                  # (B, 1, HW)
    theta_f = theta.reshape(B, Ci, Hc * Wc)
    f = jnp.sum(theta_f * g, axis=-1, keepdims=True)                       # (B, Ci, 1)
    f_x = (theta_f * f).reshape(B, Ci, Hc, Wc)
    wy = jnp.einsum('oi,bihw->bohw', p["w_w"], f_x, precision=hp) + p["w_b"][None, :, None, None]
    wy = bn(wy, p["w_bn_g"], p["w_bn_b"], p["w_bn_m"], p["w_bn_v"])
    return wy + y


# ---------------------------------------------------------------------------
if __name__ == "__main__":
    key = jax.random.PRNGKey(0)
    B, Cin, H, W = 2, 4, 16, 16
    Cout = 8
    Ci = Cout // 2          # GAM inter_channels = in_channels // 2

    ks = jax.random.split(key, 16)
    x = jax.random.normal(ks[0], (B, Cin, H, W), jnp.float32)

    params = {
        # AdjustLayer: Conv2d(Cin, Cout, 1, bias=False) + BatchNorm2d(Cout)
        "ds_w": 0.1 * jax.random.normal(ks[1], (Cout, Cin), jnp.float32),
        "ds_bn_g": 1.0 + 0.1 * jax.random.normal(ks[2], (Cout,), jnp.float32),
        "ds_bn_b": 0.1 * jax.random.normal(ks[3], (Cout,), jnp.float32),
        "ds_bn_m": 0.1 * jax.random.normal(ks[4], (Cout,), jnp.float32),
        "ds_bn_v": 0.5 + jax.random.uniform(ks[5], (Cout,), jnp.float32),
        # GAM.theta: Conv2d(Cout, Ci, 1)
        "t_w": 0.1 * jax.random.normal(ks[6], (Ci, Cout), jnp.float32),
        "t_b": 0.1 * jax.random.normal(ks[7], (Ci,), jnp.float32),
        # GAM.g: Conv2d(Ci, 1, 1)
        "g_w": 0.1 * jax.random.normal(ks[8], (1, Ci), jnp.float32),
        "g_b": 0.1 * jax.random.normal(ks[9], (1,), jnp.float32),
        # GAM.W: Conv2d(Ci, Cout, 1) + BatchNorm2d(Cout).
        # NOTE: the module's init sets this BN's weight=bias=0, which zeroes the
        # whole GAM branch; use nonzero BN params here so the test exercises the
        # full fused GAM math (a real checkpoint would have trained values).
        "w_w": 0.1 * jax.random.normal(ks[10], (Cout, Ci), jnp.float32),
        "w_b": 0.1 * jax.random.normal(ks[11], (Cout,), jnp.float32),
        "w_bn_g": 1.0 + 0.1 * jax.random.normal(ks[12], (Cout,), jnp.float32),
        "w_bn_b": 0.1 * jax.random.normal(ks[13], (Cout,), jnp.float32),
        "w_bn_m": 0.1 * jax.random.normal(ks[14], (Cout,), jnp.float32),
        "w_bn_v": 0.5 + jax.random.uniform(ks[15], (Cout,), jnp.float32),
    }

    out = jax.block_until_ready(adjust_with_gam(x, params))
    ref = reference(x, params)

    assert out.shape == (B, Cout, 7, 7), out.shape
    max_err = float(jnp.max(jnp.abs(out - ref)))
    assert jnp.allclose(out, ref, atol=1e-3, rtol=1e-3), max_err

    print("KERNEL_OK")
</pallas_src>

<mosaic_0001>
module attributes {stable_mosaic.version = 11 : i64} {
  func.func @_fused_kernel(%arg0: i32, %arg1: memref<1x4x49xf32, #tpu.memory_space<vmem>>, %arg2: memref<8x4xf32, #tpu.memory_space<vmem>>, %arg3: memref<8x1xf32, #tpu.memory_space<vmem>>, %arg4: memref<4x8xf32, #tpu.memory_space<vmem>>, %arg5: memref<4x1xf32, #tpu.memory_space<vmem>>, %arg6: memref<4x1xf32, #tpu.memory_space<vmem>>, %arg7: memref<1x1xf32, #tpu.memory_space<vmem>>, %arg8: memref<8x4xf32, #tpu.memory_space<vmem>>, %arg9: memref<8x1xf32, #tpu.memory_space<vmem>>, %arg10: memref<1x8x49xf32, #tpu.memory_space<vmem>>) attributes {dimension_semantics = [#tpu.dimension_semantics<parallel>], iteration_bounds = array<i64: 2>, scalar_prefetch = 0 : i64, scratch_operands = 0 : i64, tpu.core_type = #tpu.core_type<tc>, window_params = [{transform_indices = @transform_0, window_bounds = array<i64: 1, 4, 49>}, {pipeline_mode = #tpu.pipeline_mode<synchronous>, transform_indices = @transform_1, window_bounds = array<i64: 8, 4>}, {pipeline_mode = #tpu.pipeline_mode<synchronous>, transform_indices = @transform_2, window_bounds = array<i64: 8, 1>}, {pipeline_mode = #tpu.pipeline_mode<synchronous>, transform_indices = @transform_3, window_bounds = array<i64: 4, 8>}, {pipeline_mode = #tpu.pipeline_mode<synchronous>, transform_indices = @transform_4, window_bounds = array<i64: 4, 1>}, {pipeline_mode = #tpu.pipeline_mode<synchronous>, transform_indices = @transform_5, window_bounds = array<i64: 4, 1>}, {pipeline_mode = #tpu.pipeline_mode<synchronous>, transform_indices = @transform_6, window_bounds = array<i64: 1, 1>}, {pipeline_mode = #tpu.pipeline_mode<synchronous>, transform_indices = @transform_7, window_bounds = array<i64: 8, 4>}, {pipeline_mode = #tpu.pipeline_mode<synchronous>, transform_indices = @transform_8, window_bounds = array<i64: 8, 1>}, {transform_indices = @transform_9, window_bounds = array<i64: 1, 8, 49>}]} {
    %c0 = arith.constant 0 : index
    %c0_0 = arith.constant 0 : index
    %c0_1 = arith.constant 0 : index
    %0 = vector.load %arg1[%c0, %c0_0, %c0_1] : memref<1x4x49xf32, #tpu.memory_space<vmem>>, vector<1x4x49xf32>
    %1 = vector.shape_cast %0 : vector<1x4x49xf32> to vector<4x49xf32>
    %c0_2 = arith.constant 0 : index
    %c0_3 = arith.constant 0 : index
    %2 = vector.load %arg2[%c0_2, %c0_3] : memref<8x4xf32, #tpu.memory_space<vmem>>, vector<8x4xf32>
    %cst = arith.constant dense<0.000000e+00> : vector<8x49xf32>
    %3 = tpu.matmul %2, %1, %cst {dimension_numbers = #tpu.dot_dimension_numbers<[1], [0], [0], [1], [0, 0, 1, 1], [], []>} : vector<8x4xf32>, vector<4x49xf32>, vector<8x49xf32> -> vector<8x49xf32>
    %c0_4 = arith.constant 0 : index
    %c0_5 = arith.constant 0 : index
    %4 = vector.load %arg3[%c0_4, %c0_5] : memref<8x1xf32, #tpu.memory_space<vmem>>, vector<8x1xf32>
    %5 = vector.broadcast %4 : vector<8x1xf32> to vector<8x49xf32>
    %6 = arith.addf %3, %5 : vector<8x49xf32>
    %c0_6 = arith.constant 0 : index
    %c0_7 = arith.constant 0 : index
    %7 = vector.load %arg4[%c0_6, %c0_7] : memref<4x8xf32, #tpu.memory_space<vmem>>, vector<4x8xf32>
    %cst_8 = arith.constant dense<0.000000e+00> : vector<4x49xf32>
    %8 = tpu.matmul %7, %6, %cst_8 {dimension_numbers = #tpu.dot_dimension_numbers<[1], [0], [0], [1], [0, 0, 1, 1], [], []>} : vector<4x8xf32>, vector<8x49xf32>, vector<4x49xf32> -> vector<4x49xf32>
    %c0_9 = arith.constant 0 : index
    %c0_10 = arith.constant 0 : index
    %9 = vector.load %arg5[%c0_9, %c0_10] : memref<4x1xf32, #tpu.memory_space<vmem>>, vector<4x1xf32>
    %10 = vector.broadcast %9 : vector<4x1xf32> to vector<4x49xf32>
    %11 = arith.addf %8, %10 : vector<4x49xf32>
    %c0_11 = arith.constant 0 : index
    %c0_12 = arith.constant 0 : index
    %12 = vector.load %arg6[%c0_11, %c0_12] : memref<4x1xf32, #tpu.memory_space<vmem>>, vector<4x1xf32>
    %13 = vector.broadcast %12 : vector<4x1xf32> to vector<4x49xf32>
    %14 = arith.mulf %11, %13 : vector<4x49xf32>
    %cst_13 = arith.constant dense<0.000000e+00> : vector<49xf32>
    %15 = vector.multi_reduction <add>, %14, %cst_13 [0] : vector<4x49xf32> to vector<49xf32>
    %16 = vector.shape_cast %15 : vector<49xf32> to vector<1x49xf32>
    %c0_14 = arith.constant 0 : index
    %c0_15 = arith.constant 0 : index
    %17 = vector.load %arg7[%c0_14, %c0_15] : memref<1x1xf32, #tpu.memory_space<vmem>>, vector<1x1xf32>
    %18 = vector.broadcast %17 : vector<1x1xf32> to vector<1x49xf32>
    %19 = arith.addf %16, %18 : vector<1x49xf32>
    %cst_16 = arith.constant dense<0xFF800000> : vector<1xf32>
    %20 = vector.multi_reduction <maximumf>, %19, %cst_16 [1] : vector<1x49xf32> to vector<1xf32>
    %21 = vector.shape_cast %20 : vector<1xf32> to vector<1x1xf32>
    %22 = vector.broadcast %21 : vector<1x1xf32> to vector<1x49xf32>
    %23 = arith.subf %19, %22 : vector<1x49xf32>
    %24 = math.exp %23 : vector<1x49xf32>
    %cst_17 = arith.constant dense<0.000000e+00> : vector<1xf32>
    %25 = vector.multi_reduction <add>, %24, %cst_17 [1] : vector<1x49xf32> to vector<1xf32>
    %26 = vector.shape_cast %25 : vector<1xf32> to vector<1x1xf32>
    %27 = tpu.reciprocal %26 {approx = true} : vector<1x1xf32> -> vector<1x1xf32>
    %28 = vector.broadcast %27 : vector<1x1xf32> to vector<1x49xf32>
    %29 = arith.mulf %24, %28 : vector<1x49xf32>
    %30 = vector.broadcast %29 : vector<1x49xf32> to vector<4x49xf32>
    %31 = arith.mulf %11, %30 : vector<4x49xf32>
    %cst_18 = arith.constant dense<0.000000e+00> : vector<4xf32>
    %32 = vector.multi_reduction <add>, %31, %cst_18 [1] : vector<4x49xf32> to vector<4xf32>
    %33 = vector.shape_cast %32 : vector<4xf32> to vector<4x1xf32>
    %34 = vector.broadcast %33 : vector<4x1xf32> to vector<4x49xf32>
    %35 = arith.mulf %11, %34 : vector<4x49xf32>
    %c0_19 = arith.constant 0 : index
    %c0_20 = arith.constant 0 : index
    %36 = vector.load %arg8[%c0_19, %c0_20] : memref<8x4xf32, #tpu.memory_space<vmem>>, vector<8x4xf32>
    %cst_21 = arith.constant dense<0.000000e+00> : vector<8x49xf32>
    %37 = tpu.matmul %36, %35, %cst_21 {dimension_numbers = #tpu.dot_dimension_numbers<[1], [0], [0], [1], [0, 0, 1, 1], [], []>} : vector<8x4xf32>, vector<4x49xf32>, vector<8x49xf32> -> vector<8x49xf32>
    %c0_22 = arith.constant 0 : index
    %c0_23 = arith.constant 0 : index
    %38 = vector.load %arg9[%c0_22, %c0_23] : memref<8x1xf32, #tpu.memory_space<vmem>>, vector<8x1xf32>
    %39 = vector.broadcast %38 : vector<8x1xf32> to vector<8x49xf32>
    %40 = arith.addf %37, %39 : vector<8x49xf32>
    %41 = arith.addf %40, %6 : vector<8x49xf32>
    %c0_24 = arith.constant 0 : index
    %c0_25 = arith.constant 0 : index
    %c0_26 = arith.constant 0 : index
    %42 = vector.load %arg10[%c0_24, %c0_25, %c0_26] : memref<1x8x49xf32, #tpu.memory_space<vmem>>, vector<1x8x49xf32>
    %43 = vector.shape_cast %42 : vector<1x8x49xf32> to vector<8x49xf32>
    %44 = vector.shape_cast %41 : vector<8x49xf32> to vector<1x8x49xf32>
    tpu.vector_store %arg10[%c0_24, %c0_25, %c0_26], %44 {strides = array<i32>} : memref<1x8x49xf32, #tpu.memory_space<vmem>>, vector<1x8x49xf32>,
    return
  }
  func.func @transform_0(%arg0: i32) -> (i32, i32, i32) {
    %c0_i32 = arith.constant 0 : i32
    %c0_i32_0 = arith.constant 0 : i32
    %c0_i32_1 = arith.constant 0 : i32
    return %arg0, %c0_i32, %c0_i32_0 : i32, i32, i32
  }
  func.func @transform_1(%arg0: i32) -> (i32, i32) {
    %c0_i32 = arith.constant 0 : i32
    %c0_i32_0 = arith.constant 0 : i32
    %c0_i32_1 = arith.constant 0 : i32
    return %c0_i32, %c0_i32_0 : i32, i32
  }
  func.func @transform_2(%arg0: i32) -> (i32, i32) {
    %c0_i32 = arith.constant 0 : i32
    %c0_i32_0 = arith.constant 0 : i32
    %c0_i32_1 = arith.constant 0 : i32
    return %c0_i32, %c0_i32_0 : i32, i32
  }
  func.func @transform_3(%arg0: i32) -> (i32, i32) {
    %c0_i32 = arith.constant 0 : i32
    %c0_i32_0 = arith.constant 0 : i32
    %c0_i32_1 = arith.constant 0 : i32
    return %c0_i32, %c0_i32_0 : i32, i32
  }
  func.func @transform_4(%arg0: i32) -> (i32, i32) {
    %c0_i32 = arith.constant 0 : i32
    %c0_i32_0 = arith.constant 0 : i32
    %c0_i32_1 = arith.constant 0 : i32
    return %c0_i32, %c0_i32_0 : i32, i32
  }
  func.func @transform_5(%arg0: i32) -> (i32, i32) {
    %c0_i32 = arith.constant 0 : i32
    %c0_i32_0 = arith.constant 0 : i32
    %c0_i32_1 = arith.constant 0 : i32
    return %c0_i32, %c0_i32_0 : i32, i32
  }
  func.func @transform_6(%arg0: i32) -> (i32, i32) {
    %c0_i32 = arith.constant 0 : i32
    %c0_i32_0 = arith.constant 0 : i32
    %c0_i32_1 = arith.constant 0 : i32
    return %c0_i32, %c0_i32_0 : i32, i32
  }
  func.func @transform_7(%arg0: i32) -> (i32, i32) {
    %c0_i32 = arith.constant 0 : i32
    %c0_i32_0 = arith.constant 0 : i32
    %c0_i32_1 = arith.constant 0 : i32
    return %c0_i32, %c0_i32_0 : i32, i32
  }
  func.func @transform_8(%arg0: i32) -> (i32, i32) {
    %c0_i32 = arith.constant 0 : i32
    %c0_i32_0 = arith.constant 0 : i32
    %c0_i32_1 = arith.constant 0 : i32
    return %c0_i32, %c0_i32_0 : i32, i32
  }
  func.func @transform_9(%arg0: i32) -> (i32, i32, i32) {
    %c0_i32 = arith.constant 0 : i32
    %c0_i32_0 = arith.constant 0 : i32
    %c0_i32_1 = arith.constant 0 : i32
    return %arg0, %c0_i32, %c0_i32_0 : i32, i32, i32
  }
}

</mosaic_0001>

<llo_original>
// kernel: tpu_custom_call.1
$region0: #{tpu_custom_call.1}
  #allocation0 [shape = 'u32[]', space=smem, size = 0x4, offset = 0x4, fixed_abs, tag = 'smem constant byte address 0x4 - core index']
  #allocation1 [shape = 'u32[144,128]{1,0:T(1,128)}', space=vmem, size = 0x12000, scoped, tag = 'internal scratch']
  #allocation2 [shape = 'f32[1,1]{1,0:T(1,128)S(1)}', space=vmem, size = 0x200, scoped, tag = 'scoped memory for tpu_custom_call.1']
  %s0 = inlined_call_operand.vmem [shape: f32[2,4,49], index: 0, kind: input, shape index: {}]
  %s1 = inlined_call_operand.vmem [shape: f32[8,4], index: 1, kind: input, shape index: {}]
  %s2 = inlined_call_operand.vmem [shape: f32[8,1], index: 2, kind: input, shape index: {}]
  %s3 = inlined_call_operand.vmem [shape: f32[4,8], index: 3, kind: input, shape index: {}]
  %s4 = inlined_call_operand.vmem [shape: f32[4,1], index: 4, kind: input, shape index: {}]
  %s5 = inlined_call_operand.vmem [shape: f32[4,1], index: 5, kind: input, shape index: {}]
  %s6 = inlined_call_operand.<no memory space> [shape: f32[1,1], index: 6, kind: input, shape index: {}]
  %s7 = inlined_call_operand.vmem [shape: f32[8,4], index: 7, kind: input, shape index: {}]
  %s8 = inlined_call_operand.vmem [shape: f32[8,1], index: 8, kind: input, shape index: {}]
  %s9 = inlined_call_operand.hbm [shape: f32[2,8,49], index: 9, kind: output, shape index: {}]
  %s10 = sld [smem:[#allocation0]]
  $region69: #{tpu_custom_call.1} parent=0
    _
  %s12 = ssub.s32 1, %s10
  %s13 = scalar_select 0, %s12, %s10
  %v14 = vstv %s6
  %15 = vst [vmem:[#allocation2] sm:$0x1] %v14
  $region1: #{tpu_custom_call.1} parent=0
    #allocation3 [shape = 'u8[8192]{0}', space=vmem, size = 0x2000, scoped, tag = 'output window, operand 0']
    #allocation4 [shape = 's32[2]{0}', space=sflag, size = 0x8, scoped, tag = 'scoped memory for tpu_custom_call.1']
    %16 = vsyncpa [#allocation4], 0
    %s17 = scalar_lea.sflag [#allocation4], 1
    %18 = vsyncpa %s17, 0
    loop: start=0, step=1, limit=4
    $region2: #{tpu_custom_call.1} parent=1 // loop_pre_header
      _
    $region3: #{tpu_custom_call.1} parent=1 // loop_header
      %s20 = sphi 0, %s24
      %p21 = scmp.ge.s32.totalorder %s20, 4
      %s30 = sphi 0, %s32
      %s33 = sphi 0, %s30
      %s34 = sphi 0, %s33
      %s50 = sphi 0, %s34
      %s54 = sphi 0, %s54
      %s56 = sphi 0, %s54
      %s57 = sphi 0, %s56
      %s71 = sphi 0, %s57
      %s75 = sphi 0, %s75
      %s77 = sphi 0, %s75
      %s78 = sphi 0, %s77
      %s92 = sphi 0, %s78
      %s96 = sphi 0, %s96
      %s98 = sphi 0, %s96
      %s99 = sphi 0, %s98
      %s113 = sphi 0, %s99
      %s117 = sphi 0, %s117
      %s119 = sphi 0, %s117
      %s120 = sphi 0, %s119
      %s134 = sphi 0, %s120
      %s138 = sphi 0, %s138
      %s140 = sphi 0, %s138
      %s141 = sphi 0, %s140
      %s155 = sphi 0, %s141
      %s159 = sphi 0, %s159
      %s161 = sphi 0, %s159
      %s162 = sphi 0, %s161
      %s176 = sphi 0, %s162
      %s180 = sphi 0, %s180
      %s182 = sphi 0, %s180
      %s183 = sphi 0, %s182
      %s197 = sphi 0, %s183
      %s201 = sphi 0, %s201
      %s203 = sphi 0, %s201
      %s204 = sphi 0, %s203
      %s218 = sphi 0, %s204
      %s224 = sphi 0, %s226
      %s227 = sphi 0, %s224
      %s228 = sphi 0, %s227
      %s244 = sphi 0, %s228
    $region4: #{tpu_custom_call.1} parent=1 // loop_header_branch
      %23 = sbr.rel (%p21) target = $region8
    $region5: #{tpu_custom_call.1} parent=1 // loop_body
      %s25 = ssub.s32 %s20, 1
      %s26 = ssub.s32 %s20, 2
      %s27 = sadd.s32 %s20, 1
      %s28 = ssub.s32 %s20, %s27
      %p29 = scmp.eq.s32.totalorder %s28, 0
      %s31 = sadd.s32 %s30, 1
      %s32 = scalar_select %p29, %s30, %s31
      %p35 = pneg %p29
      %p36 = scmp.eq.s32.totalorder %s20, 1
      %p37 = por %p35, %p36
      %p38 = scmp.ne.s32.totalorder %s30, %s33
      %p39 = scmp.eq.s32.totalorder %s20, 0
      %p40 = por %p38, %p39
      %p41 = scmp.ne.s32.totalorder %s30, %s33
      %p42 = scmp.eq.s32.totalorder %s25, 1
      %p43 = por %p41, %p42
      %p44 = scmp.ne.s32.totalorder %s33, %s34
      %p45 = scmp.eq.s32.totalorder %s25, 0
      %p46 = por %p44, %p45
      %p47 = scmp.ne.s32.totalorder %s33, %s34
      %p48 = scmp.eq.s32.totalorder %s26, 1
      %p49 = por %p47, %p48
      %p51 = scmp.ne.s32.totalorder %s34, %s50
      %p52 = scmp.eq.s32.totalorder %s26, 0
      %p53 = por %p51, %p52
      %s55 = sadd.s32 %s54, 1
      %p58 = scmp.eq.s32.totalorder %s20, 1
      %p59 = scmp.ne.s32.totalorder %s54, %s56
      %p60 = scmp.eq.s32.totalorder %s20, 0
      %p61 = por %p59, %p60
      %p62 = scmp.ne.s32.totalorder %s54, %s56
      %p63 = scmp.eq.s32.totalorder %s25, 1
      %p64 = por %p62, %p63
      %p65 = scmp.ne.s32.totalorder %s56, %s57
      %p66 = scmp.eq.s32.totalorder %s25, 0
      %p67 = por %p65, %p66
      %p68 = scmp.ne.s32.totalorder %s56, %s57
      %p69 = scmp.eq.s32.totalorder %s26, 1
      %p70 = por %p68, %p69
      %p72 = scmp.ne.s32.totalorder %s57, %s71
      %p73 = scmp.eq.s32.totalorder %s26, 0
      %p74 = por %p72, %p73
      %s76 = sadd.s32 %s75, 1
      %p79 = scmp.eq.s32.totalorder %s20, 1
      %p80 = scmp.ne.s32.totalorder %s75, %s77
      %p81 = scmp.eq.s32.totalorder %s20, 0
      %p82 = por %p80, %p81
      %p83 = scmp.ne.s32.totalorder %s75, %s77
      %p84 = scmp.eq.s32.totalorder %s25, 1
      %p85 = por %p83, %p84
      %p86 = scmp.ne.s32.totalorder %s77, %s78
      %p87 = scmp.eq.s32.totalorder %s25, 0
      %p88 = por %p86, %p87
      %p89 = scmp.ne.s32.totalorder %s77, %s78
      %p90 = scmp.eq.s32.totalorder %s26, 1
      %p91 = por %p89, %p90
      %p93 = scmp.ne.s32.totalorder %s78, %s92
      %p94 = scmp.eq.s32.totalorder %s26, 0
      %p95 = por %p93, %p94
      %s97 = sadd.s32 %s96, 1
      %p100 = scmp.eq.s32.totalorder %s20, 1
      %p101 = scmp.ne.s32.totalorder %s96, %s98
      %p102 = scmp.eq.s32.totalorder %s20, 0
      %p103 = por %p101, %p102
      %p104 = scmp.ne.s32.totalorder %s96, %s98
      %p105 = scmp.eq.s32.totalorder %s25, 1
      %p106 = por %p104, %p105
      %p107 = scmp.ne.s32.totalorder %s98, %s99
      %p108 = scmp.eq.s32.totalorder %s25, 0
      %p109 = por %p107, %p108
      %p110 = scmp.ne.s32.totalorder %s98, %s99
      %p111 = scmp.eq.s32.totalorder %s26, 1
      %p112 = por %p110, %p111
      %p114 = scmp.ne.s32.totalorder %s99, %s113
      %p115 = scmp.eq.s32.totalorder %s26, 0
      %p116 = por %p114, %p115
      %s118 = sadd.s32 %s117, 1
      %p121 = scmp.eq.s32.totalorder %s20, 1
      %p122 = scmp.ne.s32.totalorder %s117, %s119
      %p123 = scmp.eq.s32.totalorder %s20, 0
      %p124 = por %p122, %p123
      %p125 = scmp.ne.s32.totalorder %s117, %s119
      %p126 = scmp.eq.s32.totalorder %s25, 1
      %p127 = por %p125, %p126
      %p128 = scmp.ne.s32.totalorder %s119, %s120
      %p129 = scmp.eq.s32.totalorder %s25, 0
      %p130 = por %p128, %p129
      %p131 = scmp.ne.s32.totalorder %s119, %s120
      %p132 = scmp.eq.s32.totalorder %s26, 1
      %p133 = por %p131, %p132
      %p135 = scmp.ne.s32.totalorder %s120, %s134
      %p136 = scmp.eq.s32.totalorder %s26, 0
      %p137 = por %p135, %p136
      %s139 = sadd.s32 %s138, 1
      %p142 = scmp.eq.s32.totalorder %s20, 1
      %p143 = scmp.ne.s32.totalorder %s138, %s140
      %p144 = scmp.eq.s32.totalorder %s20, 0
      %p145 = por %p143, %p144
      %p146 = scmp.ne.s32.totalorder %s138, %s140
      %p147 = scmp.eq.s32.totalorder %s25, 1
      %p148 = por %p146, %p147
      %p149 = scmp.ne.s32.totalorder %s140, %s141
      %p150 = scmp.eq.s32.totalorder %s25, 0
      %p151 = por %p149, %p150
      %p152 = scmp.ne.s32.totalorder %s140, %s141
      %p153 = scmp.eq.s32.totalorder %s26, 1
      %p154 = por %p152, %p153
      %p156 = scmp.ne.s32.totalorder %s141, %s155
      %p157 = scmp.eq.s32.totalorder %s26, 0
      %p158 = por %p156, %p157
      %s160 = sadd.s32 %s159, 1
      %p163 = scmp.eq.s32.totalorder %s20, 1
      %p164 = scmp.ne.s32.totalorder %s159, %s161
      %p165 = scmp.eq.s32.totalorder %s20, 0
      %p166 = por %p164, %p165
      %p167 = scmp.ne.s32.totalorder %s159, %s161
      %p168 = scmp.eq.s32.totalorder %s25, 1
      %p169 = por %p167, %p168
      %p170 = scmp.ne.s32.totalorder %s161, %s162
      %p171 = scmp.eq.s32.totalorder %s25, 0
      %p172 = por %p170, %p171
      %p173 = scmp.ne.s32.totalorder %s161, %s162
      %p174 = scmp.eq.s32.totalorder %s26, 1
      %p175 = por %p173, %p174
      %p177 = scmp.ne.s32.totalorder %s162, %s176
      %p178 = scmp.eq.s32.totalorder %s26, 0
      %p179 = por %p177, %p178
      %s181 = sadd.s32 %s180, 1
      %p184 = scmp.eq.s32.totalorder %s20, 1
      %p185 = scmp.ne.s32.totalorder %s180, %s182
      %p186 = scmp.eq.s32.totalorder %s20, 0
      %p187 = por %p185, %p186
      %p188 = scmp.ne.s32.totalorder %s180, %s182
      %p189 = scmp.eq.s32.totalorder %s25, 1
      %p190 = por %p188, %p189
      %p191 = scmp.ne.s32.totalorder %s182, %s183
      %p192 = scmp.eq.s32.totalorder %s25, 0
      %p193 = por %p191, %p192
      %p194 = scmp.ne.s32.totalorder %s182, %s183
      %p195 = scmp.eq.s32.totalorder %s26, 1
      %p196 = por %p194, %p195
      %p198 = scmp.ne.s32.totalorder %s183, %s197
      %p199 = scmp.eq.s32.totalorder %s26, 0
      %p200 = por %p198, %p199
      %s202 = sadd.s32 %s201, 1
      %p205 = scmp.eq.s32.totalorder %s20, 1
      %p206 = scmp.ne.s32.totalorder %s201, %s203
      %p207 = scmp.eq.s32.totalorder %s20, 0
      %p208 = por %p206, %p207
      %p209 = scmp.ne.s32.totalorder %s201, %s203
      %p210 = scmp.eq.s32.totalorder %s25, 1
      %p211 = por %p209, %p210
      %p212 = scmp.ne.s32.totalorder %s203, %s204
      %p213 = scmp.eq.s32.totalorder %s25, 0
      %p214 = por %p212, %p213
      %p215 = scmp.ne.s32.totalorder %s203, %s204
      %p216 = scmp.eq.s32.totalorder %s26, 1
      %p217 = por %p215, %p216
      %p219 = scmp.ne.s32.totalorder %s204, %s218
      %p220 = scmp.eq.s32.totalorder %s26, 0
      %p221 = por %p219, %p220
      %s222 = ssub.s32 %s20, %s27
      %p223 = scmp.eq.s32.totalorder %s222, 0
      %s225 = sadd.s32 %s224, 1
      %s226 = scalar_select %p223, %s224, %s225
      %p229 = pneg %p223
      %p230 = scmp.eq.s32.totalorder %s20, 1
      %p231 = por %p229, %p230
      %p232 = scmp.ne.s32.totalorder %s224, %s227
      %p233 = scmp.eq.s32.totalorder %s20, 0
      %p234 = por %p232, %p233
      %p235 = scmp.ne.s32.totalorder %s224, %s227
      %p236 = scmp.eq.s32.totalorder %s25, 1
      %p237 = por %p235, %p236
      %p238 = scmp.ne.s32.totalorder %s227, %s228
      %p239 = scmp.eq.s32.totalorder %s25, 0
      %p240 = por %p238, %p239
      %p241 = scmp.ne.s32.totalorder %s227, %s228
      %p242 = scmp.eq.s32.totalorder %s26, 1
      %p243 = por %p241, %p242
      %p245 = scmp.ne.s32.totalorder %s228, %s244
      %p246 = scmp.eq.s32.totalorder %s26, 0
      %p247 = por %p245, %p246
      %p248 = scmp.le.s32.totalorder 1, %s20
      %p249 = scmp.lt.s32.totalorder %s20, 3
      %p250 = pnand %p248, %p249
      %p251 = pneg %p250
      // Predicated region
      $region9: #{tpu_custom_call.1} parent=5 // pred_check
        _
      $region10: #{tpu_custom_call.1} parent=5 // pred_check_branch
        %253 = sbr.rel (%p250) target = $region12
      $region11: #{tpu_custom_call.1} parent=5 // pred_region
        %s254 = ssub.s32 %s20, 1
        // Predicated region
        $region13: #{tpu_custom_call.1} parent=11 // pred_check
          %p255 = pneg %p67
        $region14: #{tpu_custom_call.1} parent=11 // pred_check_branch
          %257 = sbr.rel (%p255) target = $region16
        $region15: #{tpu_custom_call.1} parent=11 // pred_region
          _
        $region16: #{tpu_custom_call.1} parent=11 // pred_fallthru
          _
        // Predicated region
        $region17: #{tpu_custom_call.1} parent=11 // pred_check
          %p258 = pneg %p88
        $region18: #{tpu_custom_call.1} parent=11 // pred_check_branch
          %260 = sbr.rel (%p258) target = $region20
        $region19: #{tpu_custom_call.1} parent=11 // pred_region
          _
        $region20: #{tpu_custom_call.1} parent=11 // pred_fallthru
          _
        // Predicated region
        $region21: #{tpu_custom_call.1} parent=11 // pred_check
          %p261 = pneg %p109
        $region22: #{tpu_custom_call.1} parent=11 // pred_check_branch
          %263 = sbr.rel (%p261) target = $region24
        $region23: #{tpu_custom_call.1} parent=11 // pred_region
          _
        $region24: #{tpu_custom_call.1} parent=11 // pred_fallthru
          _
        // Predicated region
        $region25: #{tpu_custom_call.1} parent=11 // pred_check
          %p264 = pneg %p130
        $region26: #{tpu_custom_call.1} parent=11 // pred_check_branch
          %266 = sbr.rel (%p264) target = $region28
        $region27: #{tpu_custom_call.1} parent=11 // pred_region
          _
        $region28: #{tpu_custom_call.1} parent=11 // pred_fallthru
          _
        // Predicated region
        $region29: #{tpu_custom_call.1} parent=11 // pred_check
          %p267 = pneg %p151
        $region30: #{tpu_custom_call.1} parent=11 // pred_check_branch
          %269 = sbr.rel (%p267) target = $region32
        $region31: #{tpu_custom_call.1} parent=11 // pred_region
          _
        $region32: #{tpu_custom_call.1} parent=11 // pred_fallthru
          _
        // Predicated region
        $region33: #{tpu_custom_call.1} parent=11 // pred_check
          %p270 = pneg %p172
        $region34: #{tpu_custom_call.1} parent=11 // pred_check_branch
          %272 = sbr.rel (%p270) target = $region36
        $region35: #{tpu_custom_call.1} parent=11 // pred_region
          _
        $region36: #{tpu_custom_call.1} parent=11 // pred_fallthru
          _
        // Predicated region
        $region37: #{tpu_custom_call.1} parent=11 // pred_check
          %p273 = pneg %p193
        $region38: #{tpu_custom_call.1} parent=11 // pred_check_branch
          %275 = sbr.rel (%p273) target = $region40
        $region39: #{tpu_custom_call.1} parent=11 // pred_region
          _
        $region40: #{tpu_custom_call.1} parent=11 // pred_fallthru
          _
        // Predicated region
        $region41: #{tpu_custom_call.1} parent=11 // pred_check
          %p276 = pneg %p214
        $region42: #{tpu_custom_call.1} parent=11 // pred_check_branch
          %278 = sbr.rel (%p276) target = $region44
        $region43: #{tpu_custom_call.1} parent=11 // pred_region
          _
        $region44: #{tpu_custom_call.1} parent=11 // pred_fallthru
          _
      $region12: #{tpu_custom_call.1} parent=5 // pred_fallthru
        _
      %p279 = scmp.lt.s32.totalorder %s20, 2
      // Predicated region
      $region45: #{tpu_custom_call.1} parent=5 // pred_check
        %p280 = pneg %p279
      $region46: #{tpu_custom_call.1} parent=5 // pred_check_branch
        %282 = sbr.rel (%p280) target = $region48
      $region47: #{tpu_custom_call.1} parent=5 // pred_region
        // Predicated region
        $region49: #{tpu_custom_call.1} parent=47 // pred_check
          %p283 = pneg %p40
        $region50: #{tpu_custom_call.1} parent=47 // pred_check_branch
          %285 = sbr.rel (%p283) target = $region52
        $region51: #{tpu_custom_call.1} parent=47 // pred_region
          %p286 = scmp.lt.s32.totalorder %s20, 1
          %s287 = scalar_select %p286, %s20, 1
          %s288 = smul.addr %s287, 4
          %s289 = scalar_lea.vmem %s0, %s288
        $region52: #{tpu_custom_call.1} parent=47 // pred_fallthru
          _
      $region48: #{tpu_custom_call.1} parent=5 // pred_fallthru
        _
      %p290 = scmp.le.s32.totalorder 1, %s20
      %p291 = scmp.lt.s32.totalorder %s20, 3
      %p292 = pnand %p290, %p291
      %p293 = pneg %p292
      // Predicated region
      $region53: #{tpu_custom_call.1} parent=5 // pred_check
        _
      $region54: #{tpu_custom_call.1} parent=5 // pred_check_branch
        %295 = sbr.rel (%p292) target = $region56
      $region55: #{tpu_custom_call.1} parent=5 // pred_region
        %s296 = ssub.s32 %s20, 1
        %p297 = scmp.lt.s32.totalorder %s25, 1
        %s298 = scalar_select %p297, %s25, 1
        %s299 = smul.addr %s298, 4
        %s300 = scalar_lea.vmem %s0, %s299
        %p301 = pneg %p46
        %p302 = pneg %p43
        %p303 = pneg %p67
        %p304 = pneg %p64
        %p305 = pneg %p88
        %p306 = pneg %p85
        %p307 = pneg %p109
        %p308 = pneg %p106
        %p309 = pneg %p130
        %p310 = pneg %p127
        %p311 = pneg %p151
        %p312 = pneg %p148
        %p313 = pneg %p172
        %p314 = pneg %p169
        %p315 = pneg %p193
        %p316 = pneg %p190
        %p317 = pneg %p214
        %p318 = pneg %p211
        %p319 = pneg %p240
        %p320 = pneg %p237
        %s321 = sand.u32 %s227, 1
        %s322 = scalar_lea.sflag [#allocation4], %s321
        %s323 = sand.u32 %s227, 1
        %s324 = smul.addr %s323, 8
        %s325 = scalar_lea.vmem [#allocation3], %s324
        %p326 = scmp.lt.s32.totalorder %s25, 1
        %s327 = scalar_select %p326, %s25, 1
        %s328 = smul.addr %s327, 4
        %s329 = scalar_lea.vmem %s0, %s328
        %v330 = vld [vmem:[%s329] sm:$0xf]
        %v331 = vld [vmem:[%s1] sm:$0xff]
        %v332 = vld [vmem:[%s2] sm:$0xff]
        %334 = vset.pattern.permute.xlu0 0
        %335 = vperm.xlu0 %334, %v332
        %v336 = vpop.permute.xlu0 %335
        %vm338 = vcmask 31744
        %v340 = vsel %vm338, %v331, 0
        %vm342 = vcmask 1043456
        %v344 = vsel %vm342, %v330, 0
        %346 = vmatprep.subr.mxu0 0.0
        %347 = vmatpush1.msra.mxu0 %v344
        %348 = vmatprep.subr.mxu0 0.0
        %349 = vmatpush1.msra.mxu0 0.0
        %350 = vmatprep.subr.mxu0 0.0
        %351 = vmatpush1.msra.mxu0 0.0
        %352 = vmatprep.subr.mxu0 0.0
        %353 = vmatpush1.msra.mxu0 0.0
        %354 = vmatprep.subr.mxu0 0.0
        %355 = vmatpush1.msra.mxu0 0.0
        %356 = vmatprep.subr.mxu0 0.0
        %357 = vmatpush1.msra.mxu0 0.0
        %358 = vmatprep.subr.mxu0 0.0
        %359 = vmatpush1.msra.mxu0 0.0
        %360 = vmatprep.subr.mxu0 0.0
        %361 = vmatpush1.msra.mxu0 0.0
        %362 = vmatprep.subr.mxu0 0.0
        %363 = vmatpush1.msra.mxu0 0.0
        %364 = vmatprep.subr.mxu0 0.0
        %365 = vmatpush1.msra.mxu0 0.0
        %366 = vmatprep.subr.mxu0 0.0
        %367 = vmatpush1.msra.mxu0 0.0
        %368 = vmatprep.subr.mxu0 0.0
        %369 = vmatpush1.msra.mxu0 0.0
        %370 = vmatprep.subr.mxu0 0.0
        %371 = vmatpush1.msra.mxu0 0.0
        %372 = vmatprep.subr.mxu0 0.0
        %373 = vmatpush1.msra.mxu0 0.0
        %374 = vmatprep.subr.mxu0 0.0
        %375 = vmatpush1.msra.mxu0 0.0
        %376 = vmatprep.subr.mxu0 0.0
        %377 = vmatpush1.msra.mxu0 0.0
        %378 = vmatprep.subr.mxu0 0.0
        %379 = vmatpush1.msra.mxu0 0.0
        %380 = vmatprep.subr.mxu0 0.0
        %381 = vmatpush1.msra.mxu0 0.0
        %382 = vmatprep.subr.mxu0 0.0
        %383 = vmatpush1.msra.mxu0 0.0
        %384 = vmatprep.subr.mxu0 0.0
        %385 = vmatpush1.msra.mxu0 0.0
        %386 = vmatprep.subr.mxu0 0.0
        %387 = vmatpush1.msra.mxu0 0.0
        %388 = vmatprep.subr.mxu0 0.0
        %389 = vmatpush1.msra.mxu0 0.0
        %390 = vmatprep.subr.mxu0 0.0
        %391 = vmatpush1.msra.mxu0 0.0
        %392 = vmatprep.subr.mxu0 0.0
        %393 = vmatpush1.msra.mxu0 0.0
        %394 = vmatprep.subr.mxu0 0.0
        %395 = vmatpush1.msra.mxu0 0.0
        %396 = vmatprep.subr.mxu0 0.0
        %397 = vmatpush1.msra.mxu0 0.0
        %398 = vmatprep.subr.mxu0 0.0
        %399 = vmatpush1.msra.mxu0 0.0
        %400 = vmatprep.subr.mxu0 0.0
        %401 = vmatpush1.msra.mxu0 0.0
        %402 = vmatprep.subr.mxu0 0.0
        %403 = vmatpush1.msra.mxu0 0.0
        %404 = vmatprep.subr.mxu0 0.0
        %405 = vmatpush1.msra.mxu0 0.0
        %406 = vmatprep.subr.mxu0 0.0
        %407 = vmatpush1.msra.mxu0 0.0
        %408 = vmatprep.subr.mxu0 0.0
        %409 = vmatpush1.msra.mxu0 0.0
        %410 = vmatprep.mubr.f32.mxu0 0.0
        %411 = vmatmul.mubr.f32.gmra.mrb[0].mxu0 %v340
        %v412 = vpop.f32.mrb[0].mxu0
        %v413 = vadd.f32 %v336, %v412
        %v414 = vpop.f32.mrb[0].mxu0
        %415 = vdwg.mxu0
        %v416 = vld [vmem:[%s3] sm:$0xf]
        %v417 = vld [vmem:[%s4] sm:$0xf]
        %419 = vset.pattern.permute.xlu0 0
        %420 = vperm.xlu0 %419, %v417
        %v421 = vpop.permute.xlu0 %420
        %vm423 = vcmask 64512
        %v425 = vsel %vm423, %v416, 0
        %427 = vmatprep.subr.mxu0 0.0
        %428 = vmatpush1.msra.mxu0 %v413
        %429 = vmatprep.subr.mxu0 0.0
        %430 = vmatpush1.msra.mxu0 0.0
        %431 = vmatprep.subr.mxu0 0.0
        %432 = vmatpush1.msra.mxu0 0.0
        %433 = vmatprep.subr.mxu0 0.0
        %434 = vmatpush1.msra.mxu0 0.0
        %435 = vmatprep.subr.mxu0 0.0
        %436 = vmatpush1.msra.mxu0 0.0
        %437 = vmatprep.subr.mxu0 0.0
        %438 = vmatpush1.msra.mxu0 0.0
        %439 = vmatprep.subr.mxu0 0.0
        %440 = vmatpush1.msra.mxu0 0.0
        %441 = vmatprep.subr.mxu0 0.0
        %442 = vmatpush1.msra.mxu0 0.0
        %443 = vmatprep.subr.mxu0 0.0
        %444 = vmatpush1.msra.mxu0 0.0
        %445 = vmatprep.subr.mxu0 0.0
        %446 = vmatpush1.msra.mxu0 0.0
        %447 = vmatprep.subr.mxu0 0.0
        %448 = vmatpush1.msra.mxu0 0.0
        %449 = vmatprep.subr.mxu0 0.0
        %450 = vmatpush1.msra.mxu0 0.0
        %451 = vmatprep.subr.mxu0 0.0
        %452 = vmatpush1.msra.mxu0 0.0
        %453 = vmatprep.subr.mxu0 0.0
        %454 = vmatpush1.msra.mxu0 0.0
        %455 = vmatprep.subr.mxu0 0.0
        %456 = vmatpush1.msra.mxu0 0.0
        %457 = vmatprep.subr.mxu0 0.0
        %458 = vmatpush1.msra.mxu0 0.0
        %459 = vmatprep.subr.mxu0 0.0
        %460 = vmatpush1.msra.mxu0 0.0
        %461 = vmatprep.subr.mxu0 0.0
        %462 = vmatpush1.msra.mxu0 0.0
        %463 = vmatprep.subr.mxu0 0.0
        %464 = vmatpush1.msra.mxu0 0.0
        %465 = vmatprep.subr.mxu0 0.0
        %466 = vmatpush1.msra.mxu0 0.0
        %467 = vmatprep.subr.mxu0 0.0
        %468 = vmatpush1.msra.mxu0 0.0
        %469 = vmatprep.subr.mxu0 0.0
        %470 = vmatpush1.msra.mxu0 0.0
        %471 = vmatprep.subr.mxu0 0.0
        %472 = vmatpush1.msra.mxu0 0.0
        %473 = vmatprep.subr.mxu0 0.0
        %474 = vmatpush1.msra.mxu0 0.0
        %475 = vmatprep.subr.mxu0 0.0
        %476 = vmatpush1.msra.mxu0 0.0
        %477 = vmatprep.subr.mxu0 0.0
        %478 = vmatpush1.msra.mxu0 0.0
        %479 = vmatprep.subr.mxu0 0.0
        %480 = vmatpush1.msra.mxu0 0.0
        %481 = vmatprep.subr.mxu0 0.0
        %482 = vmatpush1.msra.mxu0 0.0
        %483 = vmatprep.subr.mxu0 0.0
        %484 = vmatpush1.msra.mxu0 0.0
        %485 = vmatprep.subr.mxu0 0.0
        %486 = vmatpush1.msra.mxu0 0.0
        %487 = vmatprep.subr.mxu0 0.0
        %488 = vmatpush1.msra.mxu0 0.0
        %489 = vmatprep.subr.mxu0 0.0
        %490 = vmatpush1.msra.mxu0 0.0
        %491 = vmatprep.mubr.f32.mxu0 0.0
        %492 = vmatmul.mubr.f32.gmra.mrb[0].mxu0 %v425
        %v493 = vpop.f32.mrb[0].mxu0
        %v494 = vadd.f32 %v421, %v493
        %v495 = vpop.f32.mrb[0].mxu0
        %496 = vdwg.mxu0
        %v497 = vld [vmem:[%s5] sm:$0xf]
        %499 = vset.pattern.permute.xlu0 0
        %500 = vperm.xlu0 %499, %v497
        %v501 = vpop.permute.xlu0 %500
        %v503 = vmul.f32 %v494, %v501
        %vm504 = vcmask 396288
        %v505 = vsel %vm504, %v503, 0.0
        %v506 = vrot.slane %v505, 4
        %v507 = vadd.f32 %v505, %v506
        %v508 = vrot.slane %v507, 2
        %v509 = vadd.f32 %v507, %v508
        %v510 = vrot.slane %v509, 1
        %v511 = vadd.f32 %v509, %v510
        %v512 = vld [vmem:[#allocation2] sm:$0x1]
        %514 = vset.pattern.permute.xlu0 0
        %515 = vperm.xlu0 %514, %v512
        %v516 = vpop.permute.xlu0 %515
        %v518 = vlaneseq
        %v519 = vshrl.u32 %v518, 7
        %v520 = vsub.s32 0, %v519
        %v521 = vrot.slane %v516, %v520
        %v522 = vadd.f32 %v511, %v521
        %vm523 = vcmask 400384
        %v524 = vsel %vm523, %v522, -inf
        %525 = vmax.xlane.f32.xlu0 %v524
        %v526 = vpop.xlane.xlu0 %525
        %v527 = vsub.f32 %v522, %v526
        %v528 = vmul.f32 %v527, 1.442695
        %v529 = vpow.pop %v528
        %v530 = vsel %vm523, %v529, 0.0
        %531 = vadd.xlane.f32.xlu0 %v530
        %v532 = vpop.xlane.xlu0 %531
        %v533 = vrcp.pop %v532
        %v534 = vmul.f32 %v529, %v533
        %v535 = vmul.f32 %v494, %v534
        %v536 = vsel %vm504, %v535, 0.0
        %537 = vadd.xlane.f32.xlu0 %v536
        %v538 = vpop.xlane.xlu0 %537
        %v539 = vmul.f32 %v494, %v538
        %v540 = vld [vmem:[%s7] sm:$0xff]
        %v541 = vld [vmem:[%s8] sm:$0xff]
        %543 = vset.pattern.permute.xlu0 0
        %544 = vperm.xlu0 %543, %v541
        %v545 = vpop.permute.xlu0 %544
        %v548 = vsel %vm338, %v540, 0
        %v551 = vsel %vm342, %v539, 0
        %553 = vmatprep.subr.mxu0 0.0
        %554 = vmatpush1.msra.mxu0 %v551
        %555 = vmatprep.subr.mxu0 0.0
        %556 = vmatpush1.msra.mxu0 0.0
        %557 = vmatprep.subr.mxu0 0.0
        %558 = vmatpush1.msra.mxu0 0.0
        %559 = vmatprep.subr.mxu0 0.0
        %560 = vmatpush1.msra.mxu0 0.0
        %561 = vmatprep.subr.mxu0 0.0
        %562 = vmatpush1.msra.mxu0 0.0
        %563 = vmatprep.subr.mxu0 0.0
        %564 = vmatpush1.msra.mxu0 0.0
        %565 = vmatprep.subr.mxu0 0.0
        %566 = vmatpush1.msra.mxu0 0.0
        %567 = vmatprep.subr.mxu0 0.0
        %568 = vmatpush1.msra.mxu0 0.0
        %569 = vmatprep.subr.mxu0 0.0
        %570 = vmatpush1.msra.mxu0 0.0
        %571 = vmatprep.subr.mxu0 0.0
        %572 = vmatpush1.msra.mxu0 0.0
        %573 = vmatprep.subr.mxu0 0.0
        %574 = vmatpush1.msra.mxu0 0.0
        %575 = vmatprep.subr.mxu0 0.0
        %576 = vmatpush1.msra.mxu0 0.0
        %577 = vmatprep.subr.mxu0 0.0
        %578 = vmatpush1.msra.mxu0 0.0
        %579 = vmatprep.subr.mxu0 0.0
        %580 = vmatpush1.msra.mxu0 0.0
        %581 = vmatprep.subr.mxu0 0.0
        %582 = vmatpush1.msra.mxu0 0.0
        %583 = vmatprep.subr.mxu0 0.0
        %584 = vmatpush1.msra.mxu0 0.0
        %585 = vmatprep.subr.mxu0 0.0
        %586 = vmatpush1.msra.mxu0 0.0
        %587 = vmatprep.subr.mxu0 0.0
        %588 = vmatpush1.msra.mxu0 0.0
        %589 = vmatprep.subr.mxu0 0.0
        %590 = vmatpush1.msra.mxu0 0.0
        %591 = vmatprep.subr.mxu0 0.0
        %592 = vmatpush1.msra.mxu0 0.0
        %593 = vmatprep.subr.mxu0 0.0
        %594 = vmatpush1.msra.mxu0 0.0
        %595 = vmatprep.subr.mxu0 0.0
        %596 = vmatpush1.msra.mxu0 0.0
        %597 = vmatprep.subr.mxu0 0.0
        %598 = vmatpush1.msra.mxu0 0.0
        %599 = vmatprep.subr.mxu0 0.0
        %600 = vmatpush1.msra.mxu0 0.0
        %601 = vmatprep.subr.mxu0 0.0
        %602 = vmatpush1.msra.mxu0 0.0
        %603 = vmatprep.subr.mxu0 0.0
        %604 = vmatpush1.msra.mxu0 0.0
        %605 = vmatprep.subr.mxu0 0.0
        %606 = vmatpush1.msra.mxu0 0.0
        %607 = vmatprep.subr.mxu0 0.0
        %608 = vmatpush1.msra.mxu0 0.0
        %609 = vmatprep.subr.mxu0 0.0
        %610 = vmatpush1.msra.mxu0 0.0
        %611 = vmatprep.subr.mxu0 0.0
        %612 = vmatpush1.msra.mxu0 0.0
        %613 = vmatprep.subr.mxu0 0.0
        %614 = vmatpush1.msra.mxu0 0.0
        %615 = vmatprep.subr.mxu0 0.0
        %616 = vmatpush1.msra.mxu0 0.0
        %617 = vmatprep.mubr.f32.mxu0 0.0
        %618 = vmatmul.mubr.f32.gmra.mrb[0].mxu0 %v548
        %v619 = vpop.f32.mrb[0].mxu0
        %v620 = vadd.f32 %v545, %v619
        %v621 = vpop.f32.mrb[0].mxu0
        %622 = vdwg.mxu0
        %v623 = vadd.f32 %v620, %v413
        %624 = vst.msk [vmem:[%s325] sm:$0xff] %vm523, %v623
        %s625 = sand.u32 %s227, 1
        %s626 = scalar_lea.sflag [#allocation4], %s625
        %s627 = sand.u32 %s227, 1
        %s628 = smul.addr %s627, 8
        %s629 = scalar_lea.vmem [#allocation3], %s628
        // Predicated region
        $region57: #{tpu_custom_call.1} parent=55 // pred_check
          %p630 = pneg %p237
        $region58: #{tpu_custom_call.1} parent=55 // pred_check_branch
          %632 = sbr.rel (%p630) target = $region60
        $region59: #{tpu_custom_call.1} parent=55 // pred_region
          %s634 = ssub.s32 128, 128
          %635 = vsyncadd %s626, %s634
          %s636 = smul.addr %s25, 128
          %s637 = scalar_lea.hbm %s9, %s636
          %s639 = sshll.u32 %s629, 4
          %s640 = int_to_ptr.vmem [resolvable:$true] %s639
          %642 = dma.vmem_to_hbm [thread:$0]  %s640, 128, %s637, %s626
        $region60: #{tpu_custom_call.1} parent=55 // pred_fallthru
          _
      $region56: #{tpu_custom_call.1} parent=5 // pred_fallthru
        _
      %p643 = scmp.le.s32.totalorder 2, %s20
      // Predicated region
      $region61: #{tpu_custom_call.1} parent=5 // pred_check
        %p644 = pneg %p643
      $region62: #{tpu_custom_call.1} parent=5 // pred_check_branch
        %646 = sbr.rel (%p644) target = $region64
      $region63: #{tpu_custom_call.1} parent=5 // pred_region
        %s647 = ssub.s32 %s20, 2
        // Predicated region
        $region65: #{tpu_custom_call.1} parent=63 // pred_check
          %p648 = pneg %p243
        $region66: #{tpu_custom_call.1} parent=63 // pred_check_branch
          %650 = sbr.rel (%p648) target = $region68
        $region67: #{tpu_custom_call.1} parent=63 // pred_region
          %s651 = sand.u32 %s228, 1
          %s652 = scalar_lea.sflag [#allocation4], %s651
          %s653 = sand.u32 %s228, 1
          %s654 = smul.addr %s653, 8
          %s655 = scalar_lea.vmem [#allocation3], %s654
          %656 = dma.done %s652, 128
        $region68: #{tpu_custom_call.1} parent=63 // pred_fallthru
          _
      $region64: #{tpu_custom_call.1} parent=5 // pred_fallthru
        _
    $region6: #{tpu_custom_call.1} parent=1 // loop_footer
      %s24 = sadd.s32 1, %s20
    $region7: #{tpu_custom_call.1} parent=1 // loop_footer_branch
      %19 = sbr.rel target = $region3
    $region8: #{tpu_custom_call.1} parent=1 // loop_exit
      _
    %657 = vsyncpa [#allocation4], 1
    %s658 = scalar_lea.sflag [#allocation4], 1
    %659 = vsyncpa %s658, 1

</llo_original>
